<compile_context>
chip_gen: v7x
topology: tpu7x:2x2x1
jax: 0.10.0
libtpu: 0.0.40
codegen_flags: <defaults>
</compile_context>

<pallas_src>
import jax
import jax.numpy as jnp
from jax.experimental import pallas as pl
from jax.experimental.pallas import tpu as pltpu

VMEM_SPEC = pl.BlockSpec(memory_space=pltpu.MemorySpace.VMEM)


# ------------------------------ fused kernel -------------------------------

def _fused_discriminator_kernel(
    b_ref,       # (16N, 8)  bf16  conv1 im2col, rows (class c, q, n), lanes (pool-half, tap k)
    w1_ref,      # (8, 128)  bf16  conv1 weights, block-diagonal over pool halves
    w2_ref,      # (512,128) bf16  conv2 taps stacked along K (Cin padded 64 -> 128)
    w3_ref,      # (512,128) bf16  conv3 taps (with fc1 folded in) stacked along K
    slab_ref,    # (9, 128)  f32   b1,g1,be1,b2,g2,be2,b3c(=b3@lw1+lb1),lw2,lb2
    o_ref,       # (N, 128)  f32   sigmoid broadcast across lanes (lane-dense store)
):
    f32, bf16 = jnp.float32, jnp.bfloat16
    rows = b_ref.shape[0]          # 16N
    n4 = rows // 4                 # 4N  (rows per class = rows per parity in stage 2)
    n = n4 // 4                    # N

    slab = slab_ref[...]
    b1, g1, be1 = slab[0:1], slab[1:2], slab[2:3]
    b2, g2, be2 = slab[3:4], slab[4:5], slab[5:6]
    b3c, lw2, lb2 = slab[6:7], slab[7:8], slab[8:9, 0:1]

    def lrelu(v):
        return jnp.where(v >= 0.0, v, 0.2 * v)

    def batchnorm(a, g, be):       # training-mode (biased) batch stats, per lane/channel
        nr = a.shape[0]
        mean = jnp.sum(a, axis=0, keepdims=True) / nr
        d = a - mean
        var = jnp.sum(d * d, axis=0, keepdims=True) / nr
        return d * jax.lax.rsqrt(var + 1e-5) * g + be

    # ---- stage 1: Conv1d(1->64) with both pool halves in lanes -> MaxPool -> LReLU -> BN ----
    # h1 row (c,q,n): lanes 0..63 = conv1 time 2s (s = 4q+c), lanes 64..127 = conv1 time 2s+1.
    h1 = jnp.dot(b_ref[...], w1_ref[...], preferred_element_type=f32)          # (16N,128)
    pooled = jnp.maximum(h1, pltpu.roll(h1, shift=64, axis=1)) + b1            # max over halves,
    z1 = batchnorm(lrelu(pooled), g1, be1)                                     # bias after max
    # lanes 64..127 now hold duplicated channel data; conv2's zero-padded Cin rows ignore them.

    # ---- stage 2: Conv1d(64->128, k=4, s=2, p=1) -> MaxPool -> LReLU -> BN ----
    # class-c block = contiguous 4N rows ordered (q, n); q plays the role of pooled2 time v.
    zc = [z1[i * n4:(i + 1) * n4] for i in range(4)]
    zpad = jnp.zeros((n, 128), f32)
    z3_prev = jnp.concatenate([zpad, zc[3][: 3 * n]], axis=0)   # pooled1 time 4v-1 (left pad)
    z0_next = jnp.concatenate([zc[0][n:], zpad], axis=0)        # pooled1 time 4v+4 (right pad)
    # even conv2 times t=2v   use pooled1 times {4v-1, 4v, 4v+1, 4v+2}
    # odd  conv2 times t=2v+1 use pooled1 times {4v+1, 4v+2, 4v+3, 4v+4}
    lhs_e = jnp.concatenate([z3_prev, zc[0], zc[1], zc[2]], axis=1).astype(bf16)   # (4N,512)
    lhs_o = jnp.concatenate([zc[1], zc[2], zc[3], z0_next], axis=1).astype(bf16)   # (4N,512)
    w2 = w2_ref[...]
    h2e = jnp.dot(lhs_e, w2, preferred_element_type=f32)        # one deep-K push per parity
    h2o = jnp.dot(lhs_o, w2, preferred_element_type=f32)
    z2 = batchnorm(lrelu(jnp.maximum(h2e, h2o) + b2), g2, be2)  # (4N,128), rows (v, n)

    # ---- stage 3: Conv1d(128->128, k=4, p=0) with Linear(128,24) folded in, + Tanh ----
    lhs3 = jnp.concatenate([z2[v * n:(v + 1) * n] for v in range(4)], axis=1).astype(bf16)
    pre = jnp.dot(lhs3, w3_ref[...], preferred_element_type=f32) + b3c          # (N,128)
    h = jnp.tanh(pre)                                            # lanes >= 24 are tanh(0) = 0

    # ---- head: Linear(24,1) + Sigmoid ----
    zlin = jnp.sum(h * lw2, axis=1, keepdims=True) + lb2                         # (N,1)
    sig = pl.reciprocal(1.0 + jnp.exp(-zlin), approx=True)                       # EUP sigmoid
    o_ref[...] = jnp.broadcast_to(sig, o_ref.shape)              # lane-dense store


# ------------------------------ JAX glue ------------------------------------

def _conv1_patches(x2d):
    """Im2col for conv1 (Cin=1): rows (class c, q, n), lanes (pool-half, tap k)."""
    n = x2d.shape[0]
    xp = jnp.pad(x2d, ((0, 0), (1, 1)))                          # padding = 1 -> (N, 66)
    c = jnp.arange(4); q = jnp.arange(4); half = jnp.arange(2); k = jnp.arange(4)
    # conv1 output time t = 8q + 2c + half; its window is padded positions 2t + k.
    idx = (4 * c[:, None, None, None] + 16 * q[None, :, None, None]
           + 2 * half[None, None, :, None] + k[None, None, None, :])   # (4,4,2,4)
    cols = jnp.take(xp, idx.reshape(-1), axis=1).reshape(n, 4, 4, 2, 4)
    cols = jnp.transpose(cols, (1, 2, 0, 3, 4)).reshape(16 * n, 8)      # rows (c, q, n)
    return cols.astype(jnp.bfloat16)


def pack_params(p):
    """One-time parameter packing (hoisted out of the per-call path)."""
    f32, bf16 = jnp.float32, jnp.bfloat16
    # conv1: block-diagonal over pool halves -> (8,128): lanes 0..63 = half 0, 64..127 = half 1
    w1 = jnp.zeros((8, 128), f32)
    w1 = w1.at[0:4, 0:64].set(p['w1'][:, 0, :].T)
    w1 = w1.at[4:8, 64:128].set(p['w1'][:, 0, :].T)
    w1 = w1.astype(bf16)
    # conv2: taps stacked along K -> (512,128), Cin zero-padded 64 -> 128
    w2p = jnp.zeros((4, 128, 128), f32).at[:, :64, :].set(jnp.transpose(p['w2'], (2, 1, 0)))
    w2s = w2p.reshape(512, 128).astype(bf16)
    # conv3 with fc1 folded in (no nonlinearity in between) -- compose in f32, then cast
    w3t = jnp.transpose(p['w3'], (2, 1, 0))                       # (k, Cin, Cout)
    w3c = jnp.einsum('kio,oj->kij', w3t, p['lw1'])                 # (4, 128, 24)
    w3s = jnp.zeros((4, 128, 128), f32).at[:, :, :24].set(w3c).reshape(512, 128).astype(bf16)
    b3c = p['b3'] @ p['lw1'] + p['lb1']                            # (24,)
    # f32 slab of per-channel rows (single small DMA)
    slab = jnp.zeros((9, 128), f32)
    slab = slab.at[0, :64].set(p['b1'])
    slab = slab.at[1, :].set(1.0).at[1, :64].set(p['g1'])
    slab = slab.at[2, :64].set(p['be1'])
    slab = slab.at[3, :].set(p['b2'])
    slab = slab.at[4, :].set(p['g2'])
    slab = slab.at[5, :].set(p['be2'])
    slab = slab.at[6, :24].set(b3c)
    slab = slab.at[7, :24].set(p['lw2'][:, 0])
    slab = slab.at[8, :].set(p['lb2'][0])
    return w1, w2s, w3s, slab


@jax.jit
def discriminator_forward(x_ncl, w1, w2s, w3s, slab):
    """x_ncl: (N, 1, 64) float32 in PyTorch NCL layout.  Returns (N, 1) in (0, 1)."""
    n = x_ncl.shape[0]
    b_all = _conv1_patches(x_ncl[:, 0, :])
    # TODO(synk): for large batches add a grid over N ("parallel" across v7x's 2 TensorCores,
    # tiles budgeted against 64 MiB VMEM with explicit vmem_limit_bytes) and switch BatchNorm
    # to cross-tile sum / sum-of-squares accumulators; at this size one launch is fastest.
    out = pl.pallas_call(
        _fused_discriminator_kernel,
        out_shape=jax.ShapeDtypeStruct((n, 128), jnp.float32),
        in_specs=[VMEM_SPEC] * 5,
        out_specs=VMEM_SPEC,
    )(b_all, w1, w2s, w3s, slab)
    return out[:, :1]


# --------------------------- reference & params -----------------------------

def _reference_forward(x_ncl, p):
    """Plain-jnp (f32) re-implementation of the PyTorch forward, for self-checking."""
    def conv1d(x, w, b, stride, pad):
        _, _, length = x.shape
        _, _, k = w.shape
        xp = jnp.pad(x, ((0, 0), (0, 0), (pad, pad)))
        lout = (length + 2 * pad - k) // stride + 1
        cols = jnp.stack([xp[:, :, t * stride:t * stride + k] for t in range(lout)], axis=1)
        return jnp.einsum('nlck,ock->nol', cols, w) + b[None, :, None]

    def pool_lrelu_bn(h, gamma, beta):
        n, c, length = h.shape
        a = jnp.max(h.reshape(n, c, length // 2, 2), axis=-1)
        a = jnp.where(a >= 0, a, 0.2 * a)
        mean = jnp.mean(a, axis=(0, 2), keepdims=True)
        var = jnp.mean((a - mean) ** 2, axis=(0, 2), keepdims=True)
        return (a - mean) * jax.lax.rsqrt(var + 1e-5) * gamma[None, :, None] + beta[None, :, None]

    h = conv1d(x_ncl, p['w1'], p['b1'], 2, 1)
    h = pool_lrelu_bn(h, p['g1'], p['be1'])
    h = conv1d(h, p['w2'], p['b2'], 2, 1)
    h = pool_lrelu_bn(h, p['g2'], p['be2'])
    h = conv1d(h, p['w3'], p['b3'], 1, 0)[:, :, 0]                 # (N, 128); torch .squeeze()
    h = jnp.tanh(h @ p['lw1'] + p['lb1'])
    return jax.nn.sigmoid(h @ p['lw2'] + p['lb2'])


def init_params(key):
    ks = jax.random.split(key, 10)

    def u(k, shape, fan_in):
        bound = 1.0 / jnp.sqrt(float(fan_in))
        return jax.random.uniform(k, shape, jnp.float32, -bound, bound)

    p = {}
    p['w1'] = u(ks[0], (64, 1, 4), 1 * 4)        # Conv1d(1, 64, 4)
    p['b1'] = u(ks[1], (64,), 1 * 4)
    p['w2'] = u(ks[2], (128, 64, 4), 64 * 4)     # Conv1d(64, 128, 4)
    p['b2'] = u(ks[3], (128,), 64 * 4)
    p['w3'] = u(ks[4], (128, 128, 4), 128 * 4)   # Conv1d(128, 128, 4)
    p['b3'] = u(ks[5], (128,), 128 * 4)
    p['g1'] = jnp.ones((64,), jnp.float32)       # BatchNorm1d defaults
    p['be1'] = jnp.zeros((64,), jnp.float32)
    p['g2'] = jnp.ones((128,), jnp.float32)
    p['be2'] = jnp.zeros((128,), jnp.float32)
    p['lw1'] = u(ks[6], (128, 24), 128)          # Linear weights stored (in, out)
    p['lb1'] = u(ks[7], (24,), 128)
    p['lw2'] = u(ks[8], (24, 1), 24)
    p['lb2'] = u(ks[9], (1,), 24)
    return p


if __name__ == "__main__":
    key = jax.random.PRNGKey(0)
    pkey, xkey = jax.random.split(key)
    params = init_params(pkey)
    packed = pack_params(params)                 # packed once, outside the hot path
    # L=64 is the length the architecture implies (final conv sees L=4 -> L_out=1)
    x = jax.random.normal(xkey, (2, 1, 64), jnp.float32)          # (N, C=1, L), PyTorch NCL

    y = discriminator_forward(x, *packed)
    jax.block_until_ready(y)
    assert y.shape == (2, 1), y.shape
    assert bool(jnp.all(jnp.isfinite(y)))
    assert bool(jnp.all((y > 0.0) & (y < 1.0 + 1e-2)))

    y_ref = _reference_forward(x, params)
    assert bool(jnp.max(jnp.abs(y - y_ref)) < 5e-2), (y, y_ref)   # bf16-matmul tolerance
    print("KERNEL_OK")
</pallas_src>

<mosaic_0001>
module attributes {stable_mosaic.version = 11 : i64} {
  func.func @_fused_discriminator_kernel(%arg0: memref<32x8xbf16, #tpu.memory_space<vmem>>, %arg1: memref<8x128xbf16, #tpu.memory_space<vmem>>, %arg2: memref<512x128xbf16, #tpu.memory_space<vmem>>, %arg3: memref<512x128xbf16, #tpu.memory_space<vmem>>, %arg4: memref<9x128xf32, #tpu.memory_space<vmem>>, %arg5: memref<2x128xf32, #tpu.memory_space<vmem>>) attributes {dimension_semantics = [], scalar_prefetch = 0 : i64, scratch_operands = 0 : i64, tpu.core_type = #tpu.core_type<tc>} {
    %c0 = arith.constant 0 : index
    %c0_0 = arith.constant 0 : index
    %0 = vector.load %arg4[%c0, %c0_0] : memref<9x128xf32, #tpu.memory_space<vmem>>, vector<9x128xf32>
    %1 = vector.extract_strided_slice %0 {offsets = [0, 0], sizes = [1, 128], strides = [1, 1]} : vector<9x128xf32> to vector<1x128xf32>
    %2 = vector.extract_strided_slice %0 {offsets = [1, 0], sizes = [1, 128], strides = [1, 1]} : vector<9x128xf32> to vector<1x128xf32>
    %3 = vector.extract_strided_slice %0 {offsets = [2, 0], sizes = [1, 128], strides = [1, 1]} : vector<9x128xf32> to vector<1x128xf32>
    %4 = vector.extract_strided_slice %0 {offsets = [3, 0], sizes = [1, 128], strides = [1, 1]} : vector<9x128xf32> to vector<1x128xf32>
    %5 = vector.extract_strided_slice %0 {offsets = [4, 0], sizes = [1, 128], strides = [1, 1]} : vector<9x128xf32> to vector<1x128xf32>
    %6 = vector.extract_strided_slice %0 {offsets = [5, 0], sizes = [1, 128], strides = [1, 1]} : vector<9x128xf32> to vector<1x128xf32>
    %7 = vector.extract_strided_slice %0 {offsets = [6, 0], sizes = [1, 128], strides = [1, 1]} : vector<9x128xf32> to vector<1x128xf32>
    %8 = vector.extract_strided_slice %0 {offsets = [7, 0], sizes = [1, 128], strides = [1, 1]} : vector<9x128xf32> to vector<1x128xf32>
    %9 = vector.extract_strided_slice %0 {offsets = [8, 0], sizes = [1, 1], strides = [1, 1]} : vector<9x128xf32> to vector<1x1xf32>
    %c0_1 = arith.constant 0 : index
    %c0_2 = arith.constant 0 : index
    %10 = vector.load %arg0[%c0_1, %c0_2] : memref<32x8xbf16, #tpu.memory_space<vmem>>, vector<32x8xbf16>
    %c0_3 = arith.constant 0 : index
    %c0_4 = arith.constant 0 : index
    %11 = vector.load %arg1[%c0_3, %c0_4] : memref<8x128xbf16, #tpu.memory_space<vmem>>, vector<8x128xbf16>
    %cst = arith.constant dense<0.000000e+00> : vector<32x128xf32>
    %12 = tpu.matmul %10, %11, %cst {dimension_numbers = #tpu.dot_dimension_numbers<[1], [0], [0], [1], [0, 0, 1, 1], [], []>} : vector<32x8xbf16>, vector<8x128xbf16>, vector<32x128xf32> -> vector<32x128xf32>
    %c64_i32 = arith.constant 64 : i32
    %13 = tpu.dynamic_rotate %12 by %c64_i32 dim 1 : vector<32x128xf32>, i32 -> vector<32x128xf32>
    %14 = arith.maximumf %12, %13 : vector<32x128xf32>
    %15 = vector.broadcast %1 : vector<1x128xf32> to vector<32x128xf32>
    %16 = arith.addf %14, %15 : vector<32x128xf32>
    %cst_5 = arith.constant 0.000000e+00 : f32
    %17 = vector.broadcast %cst_5 : f32 to vector<32x128xf32>
    %18 = arith.cmpf oge, %16, %17 : vector<32x128xf32>
    %cst_6 = arith.constant 2.000000e-01 : f32
    %19 = vector.broadcast %cst_6 : f32 to vector<32x128xf32>
    %20 = arith.mulf %19, %16 : vector<32x128xf32>
    %21 = arith.select %18, %16, %20 : vector<32x128xi1>, vector<32x128xf32>
    %cst_7 = arith.constant dense<0.000000e+00> : vector<128xf32>
    %22 = vector.multi_reduction <add>, %21, %cst_7 [0] : vector<32x128xf32> to vector<128xf32>
    %23 = vector.shape_cast %22 : vector<128xf32> to vector<1x128xf32>
    %cst_8 = arith.constant 3.200000e+01 : f32
    %24 = vector.broadcast %cst_8 : f32 to vector<1x128xf32>
    %25 = arith.divf %23, %24 : vector<1x128xf32>
    %26 = vector.broadcast %25 : vector<1x128xf32> to vector<32x128xf32>
    %27 = arith.subf %21, %26 : vector<32x128xf32>
    %28 = arith.mulf %27, %27 : vector<32x128xf32>
    %cst_9 = arith.constant dense<0.000000e+00> : vector<128xf32>
    %29 = vector.multi_reduction <add>, %28, %cst_9 [0] : vector<32x128xf32> to vector<128xf32>
    %30 = vector.shape_cast %29 : vector<128xf32> to vector<1x128xf32>
    %cst_10 = arith.constant 3.200000e+01 : f32
    %31 = vector.broadcast %cst_10 : f32 to vector<1x128xf32>
    %32 = arith.divf %30, %31 : vector<1x128xf32>
    %cst_11 = arith.constant 9.99999974E-6 : f32
    %33 = vector.broadcast %cst_11 : f32 to vector<1x128xf32>
    %34 = arith.addf %32, %33 : vector<1x128xf32>
    %35 = math.rsqrt %34 : vector<1x128xf32>
    %36 = vector.broadcast %35 : vector<1x128xf32> to vector<32x128xf32>
    %37 = arith.mulf %27, %36 : vector<32x128xf32>
    %38 = vector.broadcast %2 : vector<1x128xf32> to vector<32x128xf32>
    %39 = arith.mulf %37, %38 : vector<32x128xf32>
    %40 = vector.broadcast %3 : vector<1x128xf32> to vector<32x128xf32>
    %41 = arith.addf %39, %40 : vector<32x128xf32>
    %42 = vector.extract_strided_slice %41 {offsets = [0, 0], sizes = [8, 128], strides = [1, 1]} : vector<32x128xf32> to vector<8x128xf32>
    %43 = vector.extract_strided_slice %41 {offsets = [8, 0], sizes = [8, 128], strides = [1, 1]} : vector<32x128xf32> to vector<8x128xf32>
    %44 = vector.extract_strided_slice %41 {offsets = [16, 0], sizes = [8, 128], strides = [1, 1]} : vector<32x128xf32> to vector<8x128xf32>
    %45 = vector.extract_strided_slice %41 {offsets = [24, 0], sizes = [8, 128], strides = [1, 1]} : vector<32x128xf32> to vector<8x128xf32>
    %cst_12 = arith.constant 0.000000e+00 : f32
    %46 = vector.broadcast %cst_12 : f32 to vector<2x128xf32>
    %47 = vector.extract_strided_slice %45 {offsets = [0, 0], sizes = [6, 128], strides = [1, 1]} : vector<8x128xf32> to vector<6x128xf32>
    %48 = tpu.concatenate %46, %47 in 0 : vector<2x128xf32>, vector<6x128xf32> -> vector<8x128xf32>
    %49 = vector.extract_strided_slice %42 {offsets = [2, 0], sizes = [6, 128], strides = [1, 1]} : vector<8x128xf32> to vector<6x128xf32>
    %50 = tpu.concatenate %49, %46 in 0 : vector<6x128xf32>, vector<2x128xf32> -> vector<8x128xf32>
    %51 = tpu.concatenate %48, %42, %43, %44 in 1 : vector<8x128xf32>, vector<8x128xf32>, vector<8x128xf32>, vector<8x128xf32> -> vector<8x512xf32>
    %52 = arith.truncf %51 : vector<8x512xf32> to vector<8x512xbf16>
    %53 = tpu.concatenate %43, %44, %45, %50 in 1 : vector<8x128xf32>, vector<8x128xf32>, vector<8x128xf32>, vector<8x128xf32> -> vector<8x512xf32>
    %54 = arith.truncf %53 : vector<8x512xf32> to vector<8x512xbf16>
    %c0_13 = arith.constant 0 : index
    %c0_14 = arith.constant 0 : index
    %55 = vector.load %arg2[%c0_13, %c0_14] : memref<512x128xbf16, #tpu.memory_space<vmem>>, vector<512x128xbf16>
    %cst_15 = arith.constant dense<0.000000e+00> : vector<8x128xf32>
    %56 = tpu.matmul %52, %55, %cst_15 {dimension_numbers = #tpu.dot_dimension_numbers<[1], [0], [0], [1], [0, 0, 1, 1], [], []>} : vector<8x512xbf16>, vector<512x128xbf16>, vector<8x128xf32> -> vector<8x128xf32>
    %cst_16 = arith.constant dense<0.000000e+00> : vector<8x128xf32>
    %57 = tpu.matmul %54, %55, %cst_16 {dimension_numbers = #tpu.dot_dimension_numbers<[1], [0], [0], [1], [0, 0, 1, 1], [], []>} : vector<8x512xbf16>, vector<512x128xbf16>, vector<8x128xf32> -> vector<8x128xf32>
    %58 = arith.maximumf %56, %57 : vector<8x128xf32>
    %59 = vector.broadcast %4 : vector<1x128xf32> to vector<8x128xf32>
    %60 = arith.addf %58, %59 : vector<8x128xf32>
    %cst_17 = arith.constant 0.000000e+00 : f32
    %61 = vector.broadcast %cst_17 : f32 to vector<8x128xf32>
    %62 = arith.cmpf oge, %60, %61 : vector<8x128xf32>
    %cst_18 = arith.constant 2.000000e-01 : f32
    %63 = vector.broadcast %cst_18 : f32 to vector<8x128xf32>
    %64 = arith.mulf %63, %60 : vector<8x128xf32>
    %65 = arith.select %62, %60, %64 : vector<8x128xi1>, vector<8x128xf32>
    %cst_19 = arith.constant dense<0.000000e+00> : vector<128xf32>
    %66 = vector.multi_reduction <add>, %65, %cst_19 [0] : vector<8x128xf32> to vector<128xf32>
    %67 = vector.shape_cast %66 : vector<128xf32> to vector<1x128xf32>
    %cst_20 = arith.constant 8.000000e+00 : f32
    %68 = vector.broadcast %cst_20 : f32 to vector<1x128xf32>
    %69 = arith.divf %67, %68 : vector<1x128xf32>
    %70 = vector.broadcast %69 : vector<1x128xf32> to vector<8x128xf32>
    %71 = arith.subf %65, %70 : vector<8x128xf32>
    %72 = arith.mulf %71, %71 : vector<8x128xf32>
    %cst_21 = arith.constant dense<0.000000e+00> : vector<128xf32>
    %73 = vector.multi_reduction <add>, %72, %cst_21 [0] : vector<8x128xf32> to vector<128xf32>
    %74 = vector.shape_cast %73 : vector<128xf32> to vector<1x128xf32>
    %cst_22 = arith.constant 8.000000e+00 : f32
    %75 = vector.broadcast %cst_22 : f32 to vector<1x128xf32>
    %76 = arith.divf %74, %75 : vector<1x128xf32>
    %cst_23 = arith.constant 9.99999974E-6 : f32
    %77 = vector.broadcast %cst_23 : f32 to vector<1x128xf32>
    %78 = arith.addf %76, %77 : vector<1x128xf32>
    %79 = math.rsqrt %78 : vector<1x128xf32>
    %80 = vector.broadcast %79 : vector<1x128xf32> to vector<8x128xf32>
    %81 = arith.mulf %71, %80 : vector<8x128xf32>
    %82 = vector.broadcast %5 : vector<1x128xf32> to vector<8x128xf32>
    %83 = arith.mulf %81, %82 : vector<8x128xf32>
    %84 = vector.broadcast %6 : vector<1x128xf32> to vector<8x128xf32>
    %85 = arith.addf %83, %84 : vector<8x128xf32>
    %86 = vector.extract_strided_slice %85 {offsets = [0, 0], sizes = [2, 128], strides = [1, 1]} : vector<8x128xf32> to vector<2x128xf32>
    %87 = vector.extract_strided_slice %85 {offsets = [2, 0], sizes = [2, 128], strides = [1, 1]} : vector<8x128xf32> to vector<2x128xf32>
    %88 = vector.extract_strided_slice %85 {offsets = [4, 0], sizes = [2, 128], strides = [1, 1]} : vector<8x128xf32> to vector<2x128xf32>
    %89 = vector.extract_strided_slice %85 {offsets = [6, 0], sizes = [2, 128], strides = [1, 1]} : vector<8x128xf32> to vector<2x128xf32>
    %90 = tpu.concatenate %86, %87, %88, %89 in 1 : vector<2x128xf32>, vector<2x128xf32>, vector<2x128xf32>, vector<2x128xf32> -> vector<2x512xf32>
    %91 = arith.truncf %90 : vector<2x512xf32> to vector<2x512xbf16>
    %c0_24 = arith.constant 0 : index
    %c0_25 = arith.constant 0 : index
    %92 = vector.load %arg3[%c0_24, %c0_25] : memref<512x128xbf16, #tpu.memory_space<vmem>>, vector<512x128xbf16>
    %cst_26 = arith.constant dense<0.000000e+00> : vector<2x128xf32>
    %93 = tpu.matmul %91, %92, %cst_26 {dimension_numbers = #tpu.dot_dimension_numbers<[1], [0], [0], [1], [0, 0, 1, 1], [], []>} : vector<2x512xbf16>, vector<512x128xbf16>, vector<2x128xf32> -> vector<2x128xf32>
    %94 = vector.broadcast %7 : vector<1x128xf32> to vector<2x128xf32>
    %95 = arith.addf %93, %94 : vector<2x128xf32>
    %96 = math.tanh %95 : vector<2x128xf32>
    %97 = vector.broadcast %8 : vector<1x128xf32> to vector<2x128xf32>
    %98 = arith.mulf %96, %97 : vector<2x128xf32>
    %cst_27 = arith.constant dense<0.000000e+00> : vector<2xf32>
    %99 = vector.multi_reduction <add>, %98, %cst_27 [1] : vector<2x128xf32> to vector<2xf32>
    %100 = vector.shape_cast %99 : vector<2xf32> to vector<2x1xf32>
    %101 = vector.broadcast %9 : vector<1x1xf32> to vector<2x1xf32>
    %102 = arith.addf %100, %101 : vector<2x1xf32>
    %cst_28 = arith.constant 0.000000e+00 : f32
    %103 = vector.broadcast %cst_28 : f32 to vector<2x1xf32>
    %104 = arith.subf %103, %102 : vector<2x1xf32>
    %105 = math.exp %104 : vector<2x1xf32>
    %cst_29 = arith.constant 1.000000e+00 : f32
    %106 = vector.broadcast %cst_29 : f32 to vector<2x1xf32>
    %107 = arith.addf %106, %105 : vector<2x1xf32>
    %108 = tpu.reciprocal %107 {approx = true} : vector<2x1xf32> -> vector<2x1xf32>
    %109 = vector.shape_cast %108 : vector<2x1xf32> to vector<2x1xf32>
    %110 = vector.broadcast %109 : vector<2x1xf32> to vector<2x128xf32>
    %c0_30 = arith.constant 0 : index
    %c0_31 = arith.constant 0 : index
    %111 = vector.load %arg5[%c0_30, %c0_31] : memref<2x128xf32, #tpu.memory_space<vmem>>, vector<2x128xf32>
    tpu.vector_store %arg5[%c0_30, %c0_31], %110 {strides = array<i32>} : memref<2x128xf32, #tpu.memory_space<vmem>>, vector<2x128xf32>,
    return
  }
}

</mosaic_0001>

<llo_original>
// kernel: discriminator_forward.1
$region0: #{discriminator_forward.1}
  #allocation0 [shape = 'u32[]', space=smem, size = 0x4, offset = 0x4, fixed_abs, tag = 'smem constant byte address 0x4 - core index']
  #allocation1 [shape = 'u32[144,128]{1,0:T(1,128)}', space=vmem, size = 0x12000, scoped, tag = 'internal scratch']
  %s0 = inlined_call_operand.vmem [shape: bf16[32,8], index: 0, kind: input, shape index: {}]
  %s1 = inlined_call_operand.vmem [shape: bf16[8,128], index: 1, kind: input, shape index: {}]
  %s2 = inlined_call_operand.vmem [shape: bf16[512,128], index: 2, kind: input, shape index: {}]
  %s3 = inlined_call_operand.vmem [shape: bf16[512,128], index: 3, kind: input, shape index: {}]
  %s4 = inlined_call_operand.hbm [shape: f32[9,128], index: 4, kind: input, shape index: {}]
  %s5 = inlined_call_operand.vmem [shape: f32[2,128], index: 5, kind: output, shape index: {}]
  %s6 = sld [smem:[#allocation0]]
  $region34: #{discriminator_forward.1} parent=0
    _
  %s8 = ssub.s32 1, %s6
  %s9 = scalar_select 0, %s8, %s6
  $region1: #{discriminator_forward.1} parent=0
    #allocation2 [shape = 'u8[8192]{0}', space=vmem, size = 0x2000, scoped, tag = 'input window, operand 4, single buffered']
    #allocation3 [shape = 's32[1]{0}', space=sflag, size = 0x4, scoped, tag = 'scoped memory for discriminator_forward.1']
    %10 = vsyncpa [#allocation3], 0
    // Predicated region
    $region2: #{discriminator_forward.1} parent=1 // pred_check
      _
    $region3: #{discriminator_forward.1} parent=1 // pred_check_branch
      %12 = sbr.rel (0) target = $region5
    $region4: #{discriminator_forward.1} parent=1 // pred_region
      _
    $region5: #{discriminator_forward.1} parent=1 // pred_fallthru
      _
    // Predicated region
    $region6: #{discriminator_forward.1} parent=1 // pred_check
      _
    $region7: #{discriminator_forward.1} parent=1 // pred_check_branch
      %14 = sbr.rel (0) target = $region9
    $region8: #{discriminator_forward.1} parent=1 // pred_region
      _
    $region9: #{discriminator_forward.1} parent=1 // pred_fallthru
      _
    // Predicated region
    $region10: #{discriminator_forward.1} parent=1 // pred_check
      _
    $region11: #{discriminator_forward.1} parent=1 // pred_check_branch
      %16 = sbr.rel (0) target = $region13
    $region12: #{discriminator_forward.1} parent=1 // pred_region
      _
    $region13: #{discriminator_forward.1} parent=1 // pred_fallthru
      _
    // Predicated region
    $region14: #{discriminator_forward.1} parent=1 // pred_check
      _
    $region15: #{discriminator_forward.1} parent=1 // pred_check_branch
      %18 = sbr.rel (0) target = $region17
    $region16: #{discriminator_forward.1} parent=1 // pred_region
      _
    $region17: #{discriminator_forward.1} parent=1 // pred_fallthru
      _
    // Predicated region
    $region18: #{discriminator_forward.1} parent=1 // pred_check
      _
    $region19: #{discriminator_forward.1} parent=1 // pred_check_branch
      %20 = sbr.rel (0) target = $region21
    $region20: #{discriminator_forward.1} parent=1 // pred_region
      %s22 = ssub.s32 256, 256
      %23 = vsyncadd [#allocation3], %s22
      %s24 = sshll.u32 [#allocation2], 4
      %s25 = int_to_ptr.vmem [resolvable:$true] %s24
      %30 = dma.hbm_to_vmem [thread:$0]  %s4, 256, %s25, [#allocation3], 128, 128, 8
    $region21: #{discriminator_forward.1} parent=1 // pred_fallthru
      _
    // Predicated region
    $region22: #{discriminator_forward.1} parent=1 // pred_check
      _
    $region23: #{discriminator_forward.1} parent=1 // pred_check_branch
      %32 = sbr.rel (0) target = $region25
    $region24: #{discriminator_forward.1} parent=1 // pred_region
      %33 = dma.done [#allocation3], 256
    $region25: #{discriminator_forward.1} parent=1 // pred_fallthru
      _
    %v35 = vld [vmem:[#allocation2] sm:$0xff]
    %v36 = vld [vmem:[#allocation2 + $0x8] sm:$0x1]
    %v37 = vld [vmem:[%s0] sm:$0xf]
    %v38 = vld [vmem:[%s0 + $0x4] sm:$0xf]
    %v39 = vld [vmem:[%s0 + $0x8] sm:$0xf]
    %v40 = vld [vmem:[%s0 + $0xc] sm:$0xf]
    %v41 = vld [vmem:[%s1] sm:$0xf]
    %v46 = vunpack.c.l.b16 %v37
    %v47 = vunpack.c.l.b16 %v38
    %v48 = vunpack.c.l.b16 %v39
    %v49 = vunpack.c.l.b16 %v40
    %v50 = vpack.c.b16 %v47, %v46
    %v51 = vpack.c.b16 %v49, %v48
    %vm52 = vcmask 64512
    %v54 = vsel %vm52, %v50, 0
    %v57 = vsel %vm52, %v51, 0
    %vm59 = vcmask 1043456
    %v61 = vsel %vm59, %v41, 0
    %63 = vmatprep.subr.bf16.mxu0 0
    %64 = vmatpush1.bf16.msra.mxu0 %v61
    %65 = vmatprep.subr.bf16.mxu0 0
    %66 = vmatpush1.bf16.msra.mxu0 0
    %67 = vmatprep.subr.bf16.mxu0 0
    %68 = vmatpush1.bf16.msra.mxu0 0
    %69 = vmatprep.subr.bf16.mxu0 0
    %70 = vmatpush1.bf16.msra.mxu0 0
    %71 = vmatprep.subr.bf16.mxu0 0
    %72 = vmatpush1.bf16.msra.mxu0 0
    %73 = vmatprep.subr.bf16.mxu0 0
    %74 = vmatpush1.bf16.msra.mxu0 0
    %75 = vmatprep.subr.bf16.mxu0 0
    %76 = vmatpush1.bf16.msra.mxu0 0
    %77 = vmatprep.subr.bf16.mxu0 0
    %78 = vmatpush1.bf16.msra.mxu0 0
    %79 = vmatprep.subr.bf16.mxu0 0
    %80 = vmatpush1.bf16.msra.mxu0 0
    %81 = vmatprep.subr.bf16.mxu0 0
    %82 = vmatpush1.bf16.msra.mxu0 0
    %83 = vmatprep.subr.bf16.mxu0 0
    %84 = vmatpush1.bf16.msra.mxu0 0
    %85 = vmatprep.subr.bf16.mxu0 0
    %86 = vmatpush1.bf16.msra.mxu0 0
    %87 = vmatprep.subr.bf16.mxu0 0
    %88 = vmatpush1.bf16.msra.mxu0 0
    %89 = vmatprep.subr.bf16.mxu0 0
    %90 = vmatpush1.bf16.msra.mxu0 0
    %91 = vmatprep.subr.bf16.mxu0 0
    %92 = vmatpush1.bf16.msra.mxu0 0
    %93 = vmatprep.subr.bf16.mxu0 0
    %94 = vmatpush1.bf16.msra.mxu0 0
    %95 = vmatprep.mubr.bf16.mxu0 0
    %96 = vmatmul.mubr.bf16.gmra.mrb[0].mxu0 %v54
    %v97 = vpop.f32.mrb[0].mxu0
    %v98 = vadd.f32 0.0, %v97
    %v99 = vpop.f32.mrb[0].mxu0
    %v100 = vpop.f32.mrb[0].mxu0
    %v101 = vadd.f32 0.0, %v100
    %v102 = vpop.f32.mrb[0].mxu0
    %103 = vmatprep.mubr.bf16.mxu0 0
    %104 = vmatmul.mubr.bf16.gmra.mrb[0].mxu0 %v57
    %v105 = vpop.f32.mrb[0].mxu0
    %v106 = vadd.f32 0.0, %v105
    %v107 = vpop.f32.mrb[0].mxu0
    %v108 = vpop.f32.mrb[0].mxu0
    %v109 = vadd.f32 0.0, %v108
    %v110 = vpop.f32.mrb[0].mxu0
    %111 = vdwg.mxu0
    %112 = vrot.lane.b32.xlu0 %v98, 64
    %v113 = vpop.permute.xlu0 %112
    %114 = vrot.lane.b32.xlu0 %v101, 64
    %v115 = vpop.permute.xlu0 %114
    %116 = vrot.lane.b32.xlu0 %v106, 64
    %v117 = vpop.permute.xlu0 %116
    %118 = vrot.lane.b32.xlu0 %v109, 64
    %v119 = vpop.permute.xlu0 %118
    %v120 = vmax.f32 %v98, %v113
    %v121 = vmax.f32 %v101, %v115
    %v122 = vmax.f32 %v106, %v117
    %v123 = vmax.f32 %v109, %v119
    %v124 = vlaneseq
    %v125 = vshrl.u32 %v124, 7
    %v126 = vsub.s32 0, %v125
    %v127 = vrot.slane %v35, %v126
    %v128 = vadd.f32 %v120, %v127
    %v129 = vadd.f32 %v121, %v127
    %v130 = vadd.f32 %v122, %v127
    %v131 = vadd.f32 %v123, %v127
    %vm132 = vcmp.ge.f32.partialorder %v128, 0.0
    %vm133 = vcmp.ge.f32.partialorder %v129, 0.0
    %vm134 = vcmp.ge.f32.partialorder %v130, 0.0
    %vm135 = vcmp.ge.f32.partialorder %v131, 0.0
    %v136 = vmul.f32 %v128, 0.2
    %v137 = vmul.f32 %v129, 0.2
    %v138 = vmul.f32 %v130, 0.2
    %v139 = vmul.f32 %v131, 0.2
    %v140 = vsel %vm132, %v128, %v136
    %v141 = vsel %vm133, %v129, %v137
    %v142 = vsel %vm134, %v130, %v138
    %v143 = vsel %vm135, %v131, %v139
    %v144 = vadd.f32 %v140, %v141
    %v145 = vadd.f32 %v144, %v142
    %v146 = vadd.f32 %v145, %v143
    %v147 = vrot.slane %v146, 4
    %v148 = vadd.f32 %v146, %v147
    %v149 = vrot.slane %v148, 2
    %v150 = vadd.f32 %v148, %v149
    %v151 = vrot.slane %v150, 1
    %v152 = vadd.f32 %v150, %v151
    %v153 = vrcp.pop 32.0
    %v154 = vmul.f32 %v152, %v153
    %v155 = vsub.f32 %v140, %v154
    %v156 = vsub.f32 %v141, %v154
    %v157 = vsub.f32 %v142, %v154
    %v158 = vsub.f32 %v143, %v154
    %v159 = vmul.f32 %v155, %v155
    %v160 = vmul.f32 %v156, %v156
    %v161 = vmul.f32 %v157, %v157
    %v162 = vmul.f32 %v158, %v158
    %v163 = vadd.f32 %v159, %v160
    %v164 = vadd.f32 %v163, %v161
    %v165 = vadd.f32 %v164, %v162
    %v166 = vrot.slane %v165, 4
    %v167 = vadd.f32 %v165, %v166
    %v168 = vrot.slane %v167, 2
    %v169 = vadd.f32 %v167, %v168
    %v170 = vrot.slane %v169, 1
    %v171 = vadd.f32 %v169, %v170
    %v172 = vmul.f32 %v171, %v153
    %v173 = vadd.f32 %v172, 1e-05
    %v174 = vrsqrt.pop %v173
    %v175 = vmul.f32 %v155, %v174
    %v176 = vmul.f32 %v156, %v174
    %v177 = vmul.f32 %v157, %v174
    %v178 = vmul.f32 %v158, %v174
    %v179 = vlaneseq
    %v180 = vshrl.u32 %v179, 7
    %v181 = vsub.s32 1, %v180
    %v182 = vrot.slane %v35, %v181
    %v183 = vmul.f32 %v175, %v182
    %v184 = vmul.f32 %v176, %v182
    %v185 = vmul.f32 %v177, %v182
    %v186 = vmul.f32 %v178, %v182
    %v187 = vlaneseq
    %v188 = vshrl.u32 %v187, 7
    %v189 = vsub.s32 2, %v188
    %v190 = vrot.slane %v35, %v189
    %v191 = vadd.f32 %v183, %v190
    %v192 = vadd.f32 %v184, %v190
    %v193 = vadd.f32 %v185, %v190
    %v194 = vadd.f32 %v186, %v190
    %v196 = vrot.slane %v194, 6
    %vm198 = vcmask 1041408
    %v199 = vsel %vm198, 0.0, %v196
    %v201 = vrot.slane %v191, 2
    %vm203 = vcmask 1045504
    %v204 = vsel %vm203, %v201, 0.0
    %v205 = vpack.c.bf16 %v199, %v199
    %v206 = vpack.c.bf16 %v191, %v191
    %v207 = vpack.c.bf16 %v192, %v192
    %v208 = vpack.c.bf16 %v193, %v193
    %v209 = vpack.c.bf16 %v194, %v194
    %v210 = vpack.c.bf16 %v204, %v204
    %v211 = vld [vmem:[%s2] sm:$0xf]
    %v212 = vld [vmem:[%s2 + $0x4] sm:$0xf]
    %v213 = vld [vmem:[%s2 + $0x8] sm:$0xf]
    %v214 = vld [vmem:[%s2 + $0xc] sm:$0xf]
    %v215 = vld [vmem:[%s2 + $0x10] sm:$0xf]
    %v216 = vld [vmem:[%s2 + $0x14] sm:$0xf]
    %v217 = vld [vmem:[%s2 + $0x18] sm:$0xf]
    %v218 = vld [vmem:[%s2 + $0x1c] sm:$0xf]
    %v219 = vld [vmem:[%s2 + $0x20] sm:$0xf]
    %v220 = vld [vmem:[%s2 + $0x24] sm:$0xf]
    %v221 = vld [vmem:[%s2 + $0x28] sm:$0xf]
    %v222 = vld [vmem:[%s2 + $0x2c] sm:$0xf]
    %v223 = vld [vmem:[%s2 + $0x30] sm:$0xf]
    %v224 = vld [vmem:[%s2 + $0x34] sm:$0xf]
    %v225 = vld [vmem:[%s2 + $0x38] sm:$0xf]
    %v226 = vld [vmem:[%s2 + $0x3c] sm:$0xf]
    %v227 = vld [vmem:[%s2 + $0x40] sm:$0xf]
    %v228 = vld [vmem:[%s2 + $0x44] sm:$0xf]
    %v229 = vld [vmem:[%s2 + $0x48] sm:$0xf]
    %v230 = vld [vmem:[%s2 + $0x4c] sm:$0xf]
    %v231 = vld [vmem:[%s2 + $0x50] sm:$0xf]
    %v232 = vld [vmem:[%s2 + $0x54] sm:$0xf]
    %v233 = vld [vmem:[%s2 + $0x58] sm:$0xf]
    %v234 = vld [vmem:[%s2 + $0x5c] sm:$0xf]
    %v235 = vld [vmem:[%s2 + $0x60] sm:$0xf]
    %v236 = vld [vmem:[%s2 + $0x64] sm:$0xf]
    %v237 = vld [vmem:[%s2 + $0x68] sm:$0xf]
    %v238 = vld [vmem:[%s2 + $0x6c] sm:$0xf]
    %v239 = vld [vmem:[%s2 + $0x70] sm:$0xf]
    %v240 = vld [vmem:[%s2 + $0x74] sm:$0xf]
    %v241 = vld [vmem:[%s2 + $0x78] sm:$0xf]
    %v242 = vld [vmem:[%s2 + $0x7c] sm:$0xf]
    %v243 = vld [vmem:[%s2 + $0x80] sm:$0xf]
    %v244 = vld [vmem:[%s2 + $0x84] sm:$0xf]
    %v245 = vld [vmem:[%s2 + $0x88] sm:$0xf]
    %v246 = vld [vmem:[%s2 + $0x8c] sm:$0xf]
    %v247 = vld [vmem:[%s2 + $0x90] sm:$0xf]
    %v248 = vld [vmem:[%s2 + $0x94] sm:$0xf]
    %v249 = vld [vmem:[%s2 + $0x98] sm:$0xf]
    %v250 = vld [vmem:[%s2 + $0x9c] sm:$0xf]
    %v251 = vld [vmem:[%s2 + $0xa0] sm:$0xf]
    %v252 = vld [vmem:[%s2 + $0xa4] sm:$0xf]
    %v253 = vld [vmem:[%s2 + $0xa8] sm:$0xf]
    %v254 = vld [vmem:[%s2 + $0xac] sm:$0xf]
    %v255 = vld [vmem:[%s2 + $0xb0] sm:$0xf]
    %v256 = vld [vmem:[%s2 + $0xb4] sm:$0xf]
    %v257 = vld [vmem:[%s2 + $0xb8] sm:$0xf]
    %v258 = vld [vmem:[%s2 + $0xbc] sm:$0xf]
    %v259 = vld [vmem:[%s2 + $0xc0] sm:$0xf]
    %v260 = vld [vmem:[%s2 + $0xc4] sm:$0xf]
    %v261 = vld [vmem:[%s2 + $0xc8] sm:$0xf]
    %v262 = vld [vmem:[%s2 + $0xcc] sm:$0xf]
    %v263 = vld [vmem:[%s2 + $0xd0] sm:$0xf]
    %v264 = vld [vmem:[%s2 + $0xd4] sm:$0xf]
    %v265 = vld [vmem:[%s2 + $0xd8] sm:$0xf]
    %v266 = vld [vmem:[%s2 + $0xdc] sm:$0xf]
    %v267 = vld [vmem:[%s2 + $0xe0] sm:$0xf]
    %v268 = vld [vmem:[%s2 + $0xe4] sm:$0xf]
    %v269 = vld [vmem:[%s2 + $0xe8] sm:$0xf]
    %v270 = vld [vmem:[%s2 + $0xec] sm:$0xf]
    %v271 = vld [vmem:[%s2 + $0xf0] sm:$0xf]
    %v272 = vld [vmem:[%s2 + $0xf4] sm:$0xf]
    %v273 = vld [vmem:[%s2 + $0xf8] sm:$0xf]
    %v274 = vld [vmem:[%s2 + $0xfc] sm:$0xf]
    %v339 = vunpack.c.l.b16 %v211
    %v340 = vunpack.c.l.b16 %v212
    %v341 = vunpack.c.l.b16 %v213
    %v342 = vunpack.c.l.b16 %v214
    %v343 = vunpack.c.l.b16 %v215
    %v344 = vunpack.c.l.b16 %v216
    %v345 = vunpack.c.l.b16 %v217
    %v346 = vunpack.c.l.b16 %v218
    %v347 = vunpack.c.l.b16 %v219
    %v348 = vunpack.c.l.b16 %v220
    %v349 = vunpack.c.l.b16 %v221
    %v350 = vunpack.c.l.b16 %v222
    %v351 = vunpack.c.l.b16 %v223
    %v352 = vunpack.c.l.b16 %v224
    %v353 = vunpack.c.l.b16 %v225
    %v354 = vunpack.c.l.b16 %v226
    %v355 = vunpack.c.l.b16 %v227
    %v356 = vunpack.c.l.b16 %v228
    %v357 = vunpack.c.l.b16 %v229
    %v358 = vunpack.c.l.b16 %v230
    %v359 = vunpack.c.l.b16 %v231
    %v360 = vunpack.c.l.b16 %v232
    %v361 = vunpack.c.l.b16 %v233
    %v362 = vunpack.c.l.b16 %v234
    %v363 = vunpack.c.l.b16 %v235
    %v364 = vunpack.c.l.b16 %v236
    %v365 = vunpack.c.l.b16 %v237
    %v366 = vunpack.c.l.b16 %v238
    %v367 = vunpack.c.l.b16 %v239
    %v368 = vunpack.c.l.b16 %v240
    %v369 = vunpack.c.l.b16 %v241
    %v370 = vunpack.c.l.b16 %v242
    %v371 = vunpack.c.l.b16 %v243
    %v372 = vunpack.c.l.b16 %v244
    %v373 = vunpack.c.l.b16 %v245
    %v374 = vunpack.c.l.b16 %v246
    %v375 = vunpack.c.l.b16 %v247
    %v376 = vunpack.c.l.b16 %v248
    %v377 = vunpack.c.l.b16 %v249
    %v378 = vunpack.c.l.b16 %v250
    %v379 = vunpack.c.l.b16 %v251
    %v380 = vunpack.c.l.b16 %v252
    %v381 = vunpack.c.l.b16 %v253
    %v382 = vunpack.c.l.b16 %v254
    %v383 = vunpack.c.l.b16 %v255
    %v384 = vunpack.c.l.b16 %v256
    %v385 = vunpack.c.l.b16 %v257
    %v386 = vunpack.c.l.b16 %v258
    %v387 = vunpack.c.l.b16 %v259
    %v388 = vunpack.c.l.b16 %v260
    %v389 = vunpack.c.l.b16 %v261
    %v390 = vunpack.c.l.b16 %v262
    %v391 = vunpack.c.l.b16 %v263
    %v392 = vunpack.c.l.b16 %v264
    %v393 = vunpack.c.l.b16 %v265
    %v394 = vunpack.c.l.b16 %v266
    %v395 = vunpack.c.l.b16 %v267
    %v396 = vunpack.c.l.b16 %v268
    %v397 = vunpack.c.l.b16 %v269
    %v398 = vunpack.c.l.b16 %v270
    %v399 = vunpack.c.l.b16 %v271
    %v400 = vunpack.c.l.b16 %v272
    %v401 = vunpack.c.l.b16 %v273
    %v402 = vunpack.c.l.b16 %v274
    %v403 = vpack.c.b16 %v340, %v339
    %v404 = vpack.c.b16 %v342, %v341
    %v405 = vpack.c.b16 %v344, %v343
    %v406 = vpack.c.b16 %v346, %v345
    %v407 = vpack.c.b16 %v348, %v347
    %v408 = vpack.c.b16 %v350, %v349
    %v409 = vpack.c.b16 %v352, %v351
    %v410 = vpack.c.b16 %v354, %v353
    %v411 = vpack.c.b16 %v356, %v355
    %v412 = vpack.c.b16 %v358, %v357
    %v413 = vpack.c.b16 %v360, %v359
    %v414 = vpack.c.b16 %v362, %v361
    %v415 = vpack.c.b16 %v364, %v363
    %v416 = vpack.c.b16 %v366, %v365
    %v417 = vpack.c.b16 %v368, %v367
    %v418 = vpack.c.b16 %v370, %v369
    %v419 = vpack.c.b16 %v372, %v371
    %v420 = vpack.c.b16 %v374, %v373
    %v421 = vpack.c.b16 %v376, %v375
    %v422 = vpack.c.b16 %v378, %v377
    %v423 = vpack.c.b16 %v380, %v379
    %v424 = vpack.c.b16 %v382, %v381
    %v425 = vpack.c.b16 %v384, %v383
    %v426 = vpack.c.b16 %v386, %v385
    %v427 = vpack.c.b16 %v388, %v387
    %v428 = vpack.c.b16 %v390, %v389
    %v429 = vpack.c.b16 %v392, %v391
    %v430 = vpack.c.b16 %v394, %v393
    %v431 = vpack.c.b16 %v396, %v395
    %v432 = vpack.c.b16 %v398, %v397
    %v433 = vpack.c.b16 %v400, %v399
    %v434 = vpack.c.b16 %v402, %v401
    %467 = vmatprep.subr.bf16.mxu0 0
    %468 = vmatpush1.bf16.msra.mxu0 %v403
    %469 = vmatprep.subr.bf16.mxu0 0
    %470 = vmatpush1.bf16.msra.mxu0 %v404
    %471 = vmatprep.subr.bf16.mxu0 0
    %472 = vmatpush1.bf16.msra.mxu0 %v405
    %473 = vmatprep.subr.bf16.mxu0 0
    %474 = vmatpush1.bf16.msra.mxu0 %v406
    %475 = vmatprep.subr.bf16.mxu0 0
    %476 = vmatpush1.bf16.msra.mxu0 %v407
    %477 = vmatprep.subr.bf16.mxu0 0
    %478 = vmatpush1.bf16.msra.mxu0 %v408
    %479 = vmatprep.subr.bf16.mxu0 0
    %480 = vmatpush1.bf16.msra.mxu0 %v409
    %481 = vmatprep.subr.bf16.mxu0 0
    %482 = vmatpush1.bf16.msra.mxu0 %v410
    %483 = vmatprep.subr.bf16.mxu0 0
    %484 = vmatpush1.bf16.msra.mxu0 %v411
    %485 = vmatprep.subr.bf16.mxu0 0
    %486 = vmatpush1.bf16.msra.mxu0 %v412
    %487 = vmatprep.subr.bf16.mxu0 0
    %488 = vmatpush1.bf16.msra.mxu0 %v413
    %489 = vmatprep.subr.bf16.mxu0 0
    %490 = vmatpush1.bf16.msra.mxu0 %v414
    %491 = vmatprep.subr.bf16.mxu0 0
    %492 = vmatpush1.bf16.msra.mxu0 %v415
    %493 = vmatprep.subr.bf16.mxu0 0
    %494 = vmatpush1.bf16.msra.mxu0 %v416
    %495 = vmatprep.subr.bf16.mxu0 0
    %496 = vmatpush1.bf16.msra.mxu0 %v417
    %497 = vmatprep.subr.bf16.mxu0 0
    %498 = vmatpush1.bf16.msra.mxu0 %v418
    %499 = vmatprep.mubr.bf16.mxu0 %v206
    %500 = vmatmul.mubr.bf16.gmra.mrb[0].mxu0 %v205
    %v501 = vpop.f32.mrb[0].mxu0
    %v502 = vadd.f32 0.0, %v501
    %v503 = vpop.f32.mrb[0].mxu0
    %v504 = vpop.f32.mrb[0].mxu0
    %v505 = vpop.f32.mrb[0].mxu0
    %506 = vdwg.mxu0
    %507 = vmatprep.subr.bf16.mxu0 0
    %508 = vmatpush1.bf16.msra.mxu0 %v419
    %509 = vmatprep.subr.bf16.mxu0 0
    %510 = vmatpush1.bf16.msra.mxu0 %v420
    %511 = vmatprep.subr.bf16.mxu0 0
    %512 = vmatpush1.bf16.msra.mxu0 %v421
    %513 = vmatprep.subr.bf16.mxu0 0
    %514 = vmatpush1.bf16.msra.mxu0 %v422
    %515 = vmatprep.subr.bf16.mxu0 0
    %516 = vmatpush1.bf16.msra.mxu0 %v423
    %517 = vmatprep.subr.bf16.mxu0 0
    %518 = vmatpush1.bf16.msra.mxu0 %v424
    %519 = vmatprep.subr.bf16.mxu0 0
    %520 = vmatpush1.bf16.msra.mxu0 %v425
    %521 = vmatprep.subr.bf16.mxu0 0
    %522 = vmatpush1.bf16.msra.mxu0 %v426
    %523 = vmatprep.subr.bf16.mxu0 0
    %524 = vmatpush1.bf16.msra.mxu0 %v427
    %525 = vmatprep.subr.bf16.mxu0 0
    %526 = vmatpush1.bf16.msra.mxu0 %v428
    %527 = vmatprep.subr.bf16.mxu0 0
    %528 = vmatpush1.bf16.msra.mxu0 %v429
    %529 = vmatprep.subr.bf16.mxu0 0
    %530 = vmatpush1.bf16.msra.mxu0 %v430
    %531 = vmatprep.subr.bf16.mxu0 0
    %532 = vmatpush1.bf16.msra.mxu0 %v431
    %533 = vmatprep.subr.bf16.mxu0 0
    %534 = vmatpush1.bf16.msra.mxu0 %v432
    %535 = vmatprep.subr.bf16.mxu0 0
    %536 = vmatpush1.bf16.msra.mxu0 %v433
    %537 = vmatprep.subr.bf16.mxu0 0
    %538 = vmatpush1.bf16.msra.mxu0 %v434
    %539 = vmatprep.mubr.bf16.mxu0 %v208
    %540 = vmatmul.mubr.bf16.gmra.mrb[0].mxu0 %v207
    %v541 = vpop.f32.mrb[0].mxu0
    %v542 = vadd.f32 %v502, %v541
    %v543 = vpop.f32.mrb[0].mxu0
    %v544 = vpop.f32.mrb[0].mxu0
    %v545 = vpop.f32.mrb[0].mxu0
    %546 = vdwg.mxu0
    %547 = vmatprep.subr.bf16.mxu0 0
    %548 = vmatpush1.bf16.msra.mxu0 %v403
    %549 = vmatprep.subr.bf16.mxu0 0
    %550 = vmatpush1.bf16.msra.mxu0 %v404
    %551 = vmatprep.subr.bf16.mxu0 0
    %552 = vmatpush1.bf16.msra.mxu0 %v405
    %553 = vmatprep.subr.bf16.mxu0 0
    %554 = vmatpush1.bf16.msra.mxu0 %v406
    %555 = vmatprep.subr.bf16.mxu0 0
    %556 = vmatpush1.bf16.msra.mxu0 %v407
    %557 = vmatprep.subr.bf16.mxu0 0
    %558 = vmatpush1.bf16.msra.mxu0 %v408
    %559 = vmatprep.subr.bf16.mxu0 0
    %560 = vmatpush1.bf16.msra.mxu0 %v409
    %561 = vmatprep.subr.bf16.mxu0 0
    %562 = vmatpush1.bf16.msra.mxu0 %v410
    %563 = vmatprep.subr.bf16.mxu0 0
    %564 = vmatpush1.bf16.msra.mxu0 %v411
    %565 = vmatprep.subr.bf16.mxu0 0
    %566 = vmatpush1.bf16.msra.mxu0 %v412
    %567 = vmatprep.subr.bf16.mxu0 0
    %568 = vmatpush1.bf16.msra.mxu0 %v413
    %569 = vmatprep.subr.bf16.mxu0 0
    %570 = vmatpush1.bf16.msra.mxu0 %v414
    %571 = vmatprep.subr.bf16.mxu0 0
    %572 = vmatpush1.bf16.msra.mxu0 %v415
    %573 = vmatprep.subr.bf16.mxu0 0
    %574 = vmatpush1.bf16.msra.mxu0 %v416
    %575 = vmatprep.subr.bf16.mxu0 0
    %576 = vmatpush1.bf16.msra.mxu0 %v417
    %577 = vmatprep.subr.bf16.mxu0 0
    %578 = vmatpush1.bf16.msra.mxu0 %v418
    %579 = vmatprep.mubr.bf16.mxu0 %v208
    %580 = vmatmul.mubr.bf16.gmra.mrb[0].mxu0 %v207
    %v581 = vpop.f32.mrb[0].mxu0
    %v582 = vadd.f32 0.0, %v581
    %v583 = vpop.f32.mrb[0].mxu0
    %v584 = vpop.f32.mrb[0].mxu0
    %v585 = vpop.f32.mrb[0].mxu0
    %586 = vdwg.mxu0
    %587 = vmatprep.subr.bf16.mxu0 0
    %588 = vmatpush1.bf16.msra.mxu0 %v419
    %589 = vmatprep.subr.bf16.mxu0 0
    %590 = vmatpush1.bf16.msra.mxu0 %v420
    %591 = vmatprep.subr.bf16.mxu0 0
    %592 = vmatpush1.bf16.msra.mxu0 %v421
    %593 = vmatprep.subr.bf16.mxu0 0
    %594 = vmatpush1.bf16.msra.mxu0 %v422
    %595 = vmatprep.subr.bf16.mxu0 0
    %596 = vmatpush1.bf16.msra.mxu0 %v423
    %597 = vmatprep.subr.bf16.mxu0 0
    %598 = vmatpush1.bf16.msra.mxu0 %v424
    %599 = vmatprep.subr.bf16.mxu0 0
    %600 = vmatpush1.bf16.msra.mxu0 %v425
    %601 = vmatprep.subr.bf16.mxu0 0
    %602 = vmatpush1.bf16.msra.mxu0 %v426
    %603 = vmatprep.subr.bf16.mxu0 0
    %604 = vmatpush1.bf16.msra.mxu0 %v427
    %605 = vmatprep.subr.bf16.mxu0 0
    %606 = vmatpush1.bf16.msra.mxu0 %v428
    %607 = vmatprep.subr.bf16.mxu0 0
    %608 = vmatpush1.bf16.msra.mxu0 %v429
    %609 = vmatprep.subr.bf16.mxu0 0
    %610 = vmatpush1.bf16.msra.mxu0 %v430
    %611 = vmatprep.subr.bf16.mxu0 0
    %612 = vmatpush1.bf16.msra.mxu0 %v431
    %613 = vmatprep.subr.bf16.mxu0 0
    %614 = vmatpush1.bf16.msra.mxu0 %v432
    %615 = vmatprep.subr.bf16.mxu0 0
    %616 = vmatpush1.bf16.msra.mxu0 %v433
    %617 = vmatprep.subr.bf16.mxu0 0
    %618 = vmatpush1.bf16.msra.mxu0 %v434
    %619 = vmatprep.mubr.bf16.mxu0 %v210
    %620 = vmatmul.mubr.bf16.gmra.mrb[0].mxu0 %v209
    %v621 = vpop.f32.mrb[0].mxu0
    %v622 = vadd.f32 %v582, %v621
    %v623 = vpop.f32.mrb[0].mxu0
    %v624 = vpop.f32.mrb[0].mxu0
    %v625 = vpop.f32.mrb[0].mxu0
    %626 = vdwg.mxu0
    %v627 = vmax.f32 %v542, %v622
    %v628 = vlaneseq
    %v629 = vshrl.u32 %v628, 7
    %v630 = vsub.s32 3, %v629
    %v631 = vrot.slane %v35, %v630
    %v632 = vadd.f32 %v627, %v631
    %vm633 = vcmp.ge.f32.partialorder %v632, 0.0
    %v634 = vmul.f32 %v632, 0.2
    %v635 = vsel %vm633, %v632, %v634
    %v636 = vrot.slane %v635, 4
    %v637 = vadd.f32 %v635, %v636
    %v638 = vrot.slane %v637, 2
    %v639 = vadd.f32 %v637, %v638
    %v640 = vrot.slane %v639, 1
    %v641 = vadd.f32 %v639, %v640
    %v642 = vrcp.pop 8.0
    %v643 = vmul.f32 %v641, %v642
    %v644 = vsub.f32 %v635, %v643
    %v645 = vmul.f32 %v644, %v644
    %v646 = vrot.slane %v645, 4
    %v647 = vadd.f32 %v645, %v646
    %v648 = vrot.slane %v647, 2
    %v649 = vadd.f32 %v647, %v648
    %v650 = vrot.slane %v649, 1
    %v651 = vadd.f32 %v649, %v650
    %v652 = vmul.f32 %v651, %v642
    %v653 = vadd.f32 %v652, 1e-05
    %v654 = vrsqrt.pop %v653
    %v655 = vmul.f32 %v644, %v654
    %v656 = vlaneseq
    %v657 = vshrl.u32 %v656, 7
    %v658 = vsub.s32 4, %v657
    %v659 = vrot.slane %v35, %v658
    %v660 = vmul.f32 %v655, %v659
    %v661 = vlaneseq
    %v662 = vshrl.u32 %v661, 7
    %v663 = vsub.s32 5, %v662
    %v664 = vrot.slane %v35, %v663
    %v665 = vadd.f32 %v660, %v664
    %v667 = vrot.slane %v665, 2
    %v669 = vrot.slane %v665, 4
    %v671 = vrot.slane %v665, 6
    %v673 = vpack.c.bf16 %v665, %v665
    %v674 = vpack.c.bf16 %v667, %v667
    %v675 = vpack.c.bf16 %v669, %v669
    %v676 = vpack.c.bf16 %v671, %v671
    %v677 = vld [vmem:[%s3] sm:$0xf]
    %v678 = vld [vmem:[%s3 + $0x4] sm:$0xf]
    %v679 = vld [vmem:[%s3 + $0x8] sm:$0xf]
    %v680 = vld [vmem:[%s3 + $0xc] sm:$0xf]
    %v681 = vld [vmem:[%s3 + $0x10] sm:$0xf]
    %v682 = vld [vmem:[%s3 + $0x14] sm:$0xf]
    %v683 = vld [vmem:[%s3 + $0x18] sm:$0xf]
    %v684 = vld [vmem:[%s3 + $0x1c] sm:$0xf]
    %v685 = vld [vmem:[%s3 + $0x20] sm:$0xf]
    %v686 = vld [vmem:[%s3 + $0x24] sm:$0xf]
    %v687 = vld [vmem:[%s3 + $0x28] sm:$0xf]
    %v688 = vld [vmem:[%s3 + $0x2c] sm:$0xf]
    %v689 = vld [vmem:[%s3 + $0x30] sm:$0xf]
    %v690 = vld [vmem:[%s3 + $0x34] sm:$0xf]
    %v691 = vld [vmem:[%s3 + $0x38] sm:$0xf]
    %v692 = vld [vmem:[%s3 + $0x3c] sm:$0xf]
    %v693 = vld [vmem:[%s3 + $0x40] sm:$0xf]
    %v694 = vld [vmem:[%s3 + $0x44] sm:$0xf]
    %v695 = vld [vmem:[%s3 + $0x48] sm:$0xf]
    %v696 = vld [vmem:[%s3 + $0x4c] sm:$0xf]
    %v697 = vld [vmem:[%s3 + $0x50] sm:$0xf]
    %v698 = vld [vmem:[%s3 + $0x54] sm:$0xf]
    %v699 = vld [vmem:[%s3 + $0x58] sm:$0xf]
    %v700 = vld [vmem:[%s3 + $0x5c] sm:$0xf]
    %v701 = vld [vmem:[%s3 + $0x60] sm:$0xf]
    %v702 = vld [vmem:[%s3 + $0x64] sm:$0xf]
    %v703 = vld [vmem:[%s3 + $0x68] sm:$0xf]
    %v704 = vld [vmem:[%s3 + $0x6c] sm:$0xf]
    %v705 = vld [vmem:[%s3 + $0x70] sm:$0xf]
    %v706 = vld [vmem:[%s3 + $0x74] sm:$0xf]
    %v707 = vld [vmem:[%s3 + $0x78] sm:$0xf]
    %v708 = vld [vmem:[%s3 + $0x7c] sm:$0xf]
    %v709 = vld [vmem:[%s3 + $0x80] sm:$0xf]
    %v710 = vld [vmem:[%s3 + $0x84] sm:$0xf]
    %v711 = vld [vmem:[%s3 + $0x88] sm:$0xf]
    %v712 = vld [vmem:[%s3 + $0x8c] sm:$0xf]
    %v713 = vld [vmem:[%s3 + $0x90] sm:$0xf]
    %v714 = vld [vmem:[%s3 + $0x94] sm:$0xf]
    %v715 = vld [vmem:[%s3 + $0x98] sm:$0xf]
    %v716 = vld [vmem:[%s3 + $0x9c] sm:$0xf]
    %v717 = vld [vmem:[%s3 + $0xa0] sm:$0xf]
    %v718 = vld [vmem:[%s3 + $0xa4] sm:$0xf]
    %v719 = vld [vmem:[%s3 + $0xa8] sm:$0xf]
    %v720 = vld [vmem:[%s3 + $0xac] sm:$0xf]
    %v721 = vld [vmem:[%s3 + $0xb0] sm:$0xf]
    %v722 = vld [vmem:[%s3 + $0xb4] sm:$0xf]
    %v723 = vld [vmem:[%s3 + $0xb8] sm:$0xf]
    %v724 = vld [vmem:[%s3 + $0xbc] sm:$0xf]
    %v725 = vld [vmem:[%s3 + $0xc0] sm:$0xf]
    %v726 = vld [vmem:[%s3 + $0xc4] sm:$0xf]
    %v727 = vld [vmem:[%s3 + $0xc8] sm:$0xf]
    %v728 = vld [vmem:[%s3 + $0xcc] sm:$0xf]
    %v729 = vld [vmem:[%s3 + $0xd0] sm:$0xf]
    %v730 = vld [vmem:[%s3 + $0xd4] sm:$0xf]
    %v731 = vld [vmem:[%s3 + $0xd8] sm:$0xf]
    %v732 = vld [vmem:[%s3 + $0xdc] sm:$0xf]
    %v733 = vld [vmem:[%s3 + $0xe0] sm:$0xf]
    %v734 = vld [vmem:[%s3 + $0xe4] sm:$0xf]
    %v735 = vld [vmem:[%s3 + $0xe8] sm:$0xf]
    %v736 = vld [vmem:[%s3 + $0xec] sm:$0xf]
    %v737 = vld [vmem:[%s3 + $0xf0] sm:$0xf]
    %v738 = vld [vmem:[%s3 + $0xf4] sm:$0xf]
    %v739 = vld [vmem:[%s3 + $0xf8] sm:$0xf]
    %v740 = vld [vmem:[%s3 + $0xfc] sm:$0xf]
    %v741 = vlaneseq
    %v742 = vshrl.u32 %v741, 7
    %v743 = vsub.s32 6, %v742
    %v744 = vrot.slane %v35, %v743
    %v809 = vunpack.c.l.b16 %v677
    %v810 = vunpack.c.l.b16 %v678
    %v811 = vunpack.c.l.b16 %v679
    %v812 = vunpack.c.l.b16 %v680
    %v813 = vunpack.c.l.b16 %v681
    %v814 = vunpack.c.l.b16 %v682
    %v815 = vunpack.c.l.b16 %v683
    %v816 = vunpack.c.l.b16 %v684
    %v817 = vunpack.c.l.b16 %v685
    %v818 = vunpack.c.l.b16 %v686
    %v819 = vunpack.c.l.b16 %v687
    %v820 = vunpack.c.l.b16 %v688
    %v821 = vunpack.c.l.b16 %v689
    %v822 = vunpack.c.l.b16 %v690
    %v823 = vunpack.c.l.b16 %v691
    %v824 = vunpack.c.l.b16 %v692
    %v825 = vunpack.c.l.b16 %v693
    %v826 = vunpack.c.l.b16 %v694
    %v827 = vunpack.c.l.b16 %v695
    %v828 = vunpack.c.l.b16 %v696
    %v829 = vunpack.c.l.b16 %v697
    %v830 = vunpack.c.l.b16 %v698
    %v831 = vunpack.c.l.b16 %v699
    %v832 = vunpack.c.l.b16 %v700
    %v833 = vunpack.c.l.b16 %v701
    %v834 = vunpack.c.l.b16 %v702
    %v835 = vunpack.c.l.b16 %v703
    %v836 = vunpack.c.l.b16 %v704
    %v837 = vunpack.c.l.b16 %v705
    %v838 = vunpack.c.l.b16 %v706
    %v839 = vunpack.c.l.b16 %v707
    %v840 = vunpack.c.l.b16 %v708
    %v841 = vunpack.c.l.b16 %v709
    %v842 = vunpack.c.l.b16 %v710
    %v843 = vunpack.c.l.b16 %v711
    %v844 = vunpack.c.l.b16 %v712
    %v845 = vunpack.c.l.b16 %v713
    %v846 = vunpack.c.l.b16 %v714
    %v847 = vunpack.c.l.b16 %v715
    %v848 = vunpack.c.l.b16 %v716
    %v849 = vunpack.c.l.b16 %v717
    %v850 = vunpack.c.l.b16 %v718
    %v851 = vunpack.c.l.b16 %v719
    %v852 = vunpack.c.l.b16 %v720
    %v853 = vunpack.c.l.b16 %v721
    %v854 = vunpack.c.l.b16 %v722
    %v855 = vunpack.c.l.b16 %v723
    %v856 = vunpack.c.l.b16 %v724
    %v857 = vunpack.c.l.b16 %v725
    %v858 = vunpack.c.l.b16 %v726
    %v859 = vunpack.c.l.b16 %v727
    %v860 = vunpack.c.l.b16 %v728
    %v861 = vunpack.c.l.b16 %v729
    %v862 = vunpack.c.l.b16 %v730
    %v863 = vunpack.c.l.b16 %v731
    %v864 = vunpack.c.l.b16 %v732
    %v865 = vunpack.c.l.b16 %v733
    %v866 = vunpack.c.l.b16 %v734
    %v867 = vunpack.c.l.b16 %v735
    %v868 = vunpack.c.l.b16 %v736
    %v869 = vunpack.c.l.b16 %v737
    %v870 = vunpack.c.l.b16 %v738
    %v871 = vunpack.c.l.b16 %v739
    %v872 = vunpack.c.l.b16 %v740
    %v873 = vpack.c.b16 %v810, %v809
    %v874 = vpack.c.b16 %v812, %v811
    %v875 = vpack.c.b16 %v814, %v813
    %v876 = vpack.c.b16 %v816, %v815
    %v877 = vpack.c.b16 %v818, %v817
    %v878 = vpack.c.b16 %v820, %v819
    %v879 = vpack.c.b16 %v822, %v821
    %v880 = vpack.c.b16 %v824, %v823
    %v881 = vpack.c.b16 %v826, %v825
    %v882 = vpack.c.b16 %v828, %v827
    %v883 = vpack.c.b16 %v830, %v829
    %v884 = vpack.c.b16 %v832, %v831
    %v885 = vpack.c.b16 %v834, %v833
    %v886 = vpack.c.b16 %v836, %v835
    %v887 = vpack.c.b16 %v838, %v837
    %v888 = vpack.c.b16 %v840, %v839
    %v889 = vpack.c.b16 %v842, %v841
    %v890 = vpack.c.b16 %v844, %v843
    %v891 = vpack.c.b16 %v846, %v845
    %v892 = vpack.c.b16 %v848, %v847
    %v893 = vpack.c.b16 %v850, %v849
    %v894 = vpack.c.b16 %v852, %v851
    %v895 = vpack.c.b16 %v854, %v853
    %v896 = vpack.c.b16 %v856, %v855
    %v897 = vpack.c.b16 %v858, %v857
    %v898 = vpack.c.b16 %v860, %v859
    %v899 = vpack.c.b16 %v862, %v861
    %v900 = vpack.c.b16 %v864, %v863
    %v901 = vpack.c.b16 %v866, %v865
    %v902 = vpack.c.b16 %v868, %v867
    %v903 = vpack.c.b16 %v870, %v869
    %v904 = vpack.c.b16 %v872, %v871
    %937 = vmatprep.subr.bf16.mxu0 0
    %938 = vmatpush1.bf16.msra.mxu0 %v873
    %939 = vmatprep.subr.bf16.mxu0 0
    %940 = vmatpush1.bf16.msra.mxu0 %v874
    %941 = vmatprep.subr.bf16.mxu0 0
    %942 = vmatpush1.bf16.msra.mxu0 %v875
    %943 = vmatprep.subr.bf16.mxu0 0
    %944 = vmatpush1.bf16.msra.mxu0 %v876
    %945 = vmatprep.subr.bf16.mxu0 0
    %946 = vmatpush1.bf16.msra.mxu0 %v877
    %947 = vmatprep.subr.bf16.mxu0 0
    %948 = vmatpush1.bf16.msra.mxu0 %v878
    %949 = vmatprep.subr.bf16.mxu0 0
    %950 = vmatpush1.bf16.msra.mxu0 %v879
    %951 = vmatprep.subr.bf16.mxu0 0
    %952 = vmatpush1.bf16.msra.mxu0 %v880
    %953 = vmatprep.subr.bf16.mxu0 0
    %954 = vmatpush1.bf16.msra.mxu0 %v881
    %955 = vmatprep.subr.bf16.mxu0 0
    %956 = vmatpush1.bf16.msra.mxu0 %v882
    %957 = vmatprep.subr.bf16.mxu0 0
    %958 = vmatpush1.bf16.msra.mxu0 %v883
    %959 = vmatprep.subr.bf16.mxu0 0
    %960 = vmatpush1.bf16.msra.mxu0 %v884
    %961 = vmatprep.subr.bf16.mxu0 0
    %962 = vmatpush1.bf16.msra.mxu0 %v885
    %963 = vmatprep.subr.bf16.mxu0 0
    %964 = vmatpush1.bf16.msra.mxu0 %v886
    %965 = vmatprep.subr.bf16.mxu0 0
    %966 = vmatpush1.bf16.msra.mxu0 %v887
    %967 = vmatprep.subr.bf16.mxu0 0
    %968 = vmatpush1.bf16.msra.mxu0 %v888
    %969 = vmatprep.mubr.bf16.mxu0 %v674
    %970 = vmatmul.mubr.bf16.gmra.mrb[0].mxu0 %v673
    %v971 = vpop.f32.mrb[0].mxu0
    %v972 = vadd.f32 %v744, %v971
    %v973 = vpop.f32.mrb[0].mxu0
    %v974 = vpop.f32.mrb[0].mxu0
    %v975 = vpop.f32.mrb[0].mxu0
    %976 = vdwg.mxu0
    %977 = vmatprep.subr.bf16.mxu0 0
    %978 = vmatpush1.bf16.msra.mxu0 %v889
    %979 = vmatprep.subr.bf16.mxu0 0
    %980 = vmatpush1.bf16.msra.mxu0 %v890
    %981 = vmatprep.subr.bf16.mxu0 0
    %982 = vmatpush1.bf16.msra.mxu0 %v891
    %983 = vmatprep.subr.bf16.mxu0 0
    %984 = vmatpush1.bf16.msra.mxu0 %v892
    %985 = vmatprep.subr.bf16.mxu0 0
    %986 = vmatpush1.bf16.msra.mxu0 %v893
    %987 = vmatprep.subr.bf16.mxu0 0
    %988 = vmatpush1.bf16.msra.mxu0 %v894
    %989 = vmatprep.subr.bf16.mxu0 0
    %990 = vmatpush1.bf16.msra.mxu0 %v895
    %991 = vmatprep.subr.bf16.mxu0 0
    %992 = vmatpush1.bf16.msra.mxu0 %v896
    %993 = vmatprep.subr.bf16.mxu0 0
    %994 = vmatpush1.bf16.msra.mxu0 %v897
    %995 = vmatprep.subr.bf16.mxu0 0
    %996 = vmatpush1.bf16.msra.mxu0 %v898
    %997 = vmatprep.subr.bf16.mxu0 0
    %998 = vmatpush1.bf16.msra.mxu0 %v899
    %999 = vmatprep.subr.bf16.mxu0 0
    %1000 = vmatpush1.bf16.msra.mxu0 %v900
    %1001 = vmatprep.subr.bf16.mxu0 0
    %1002 = vmatpush1.bf16.msra.mxu0 %v901
    %1003 = vmatprep.subr.bf16.mxu0 0
    %1004 = vmatpush1.bf16.msra.mxu0 %v902
    %1005 = vmatprep.subr.bf16.mxu0 0
    %1006 = vmatpush1.bf16.msra.mxu0 %v903
    %1007 = vmatprep.subr.bf16.mxu0 0
    %1008 = vmatpush1.bf16.msra.mxu0 %v904
    %1009 = vmatprep.mubr.bf16.mxu0 %v676
    %1010 = vmatmul.mubr.bf16.gmra.mrb[0].mxu0 %v675
    %v1011 = vpop.f32.mrb[0].mxu0
    %v1012 = vadd.f32 %v972, %v1011
    %v1013 = vpop.f32.mrb[0].mxu0
    %v1014 = vpop.f32.mrb[0].mxu0
    %v1015 = vpop.f32.mrb[0].mxu0
    %1016 = vdwg.mxu0
    %v1017 = vtanh.pop %v1012
    %v1018 = vlaneseq
    %v1019 = vshrl.u32 %v1018, 7
    %v1020 = vsub.s32 7, %v1019
    %v1021 = vrot.slane %v35, %v1020
    %v1022 = vmul.f32 %v1017, %v1021
    %v1023 = vsel %vm198, %v1022, 0.0
    %1024 = vadd.xlane.f32.xlu0 %v1023
    %v1025 = vpop.xlane.xlu0 %1024
    %v1026 = vlaneseq
    %v1027 = vshrl.u32 %v1026, 7
    %v1028 = vsub.s32 0, %v1027
    %v1029 = vrot.slane %v36, %v1028
    %v1030 = vadd.f32 %v1025, %v1029
    %v1031 = vsub.f32 0.0, %v1030
    %v1032 = vmul.f32 %v1031, 1.442695
    %v1033 = vpow.pop %v1032
    %v1034 = vadd.f32 %v1033, 1.0
    %v1035 = vrcp.pop %v1034
    %1037 = vset.pattern.permute.xlu0 0
    %1038 = vperm.xlu0 %1037, %v1035
    %v1039 = vpop.permute.xlu0 %1038
    %1041 = vst [vmem:[%s5] sm:$0x3] %v1039
    // Predicated region
    $region26: #{discriminator_forward.1} parent=1 // pred_check
      _
    $region27: #{discriminator_forward.1} parent=1 // pred_check_branch
      %1043 = sbr.rel (0) target = $region29
    $region28: #{discriminator_forward.1} parent=1 // pred_region
      _
    $region29: #{discriminator_forward.1} parent=1 // pred_fallthru
      _
    // Predicated region
    $region30: #{discriminator_forward.1} parent=1 // pred_check
      _
    $region31: #{discriminator_forward.1} parent=1 // pred_check_branch
      %1045 = sbr.rel (0) target = $region33
    $region32: #{discriminator_forward.1} parent=1 // pred_region
      _
    $region33: #{discriminator_forward.1} parent=1 // pred_fallthru
      _
    %1046 = vsyncpa [#allocation3], 1

</llo_original>
